<compile_context>
chip_gen: v7x
topology: tpu7x:2x2x1
jax: 0.10.0
libtpu: 0.0.40
codegen_flags: <defaults>
</compile_context>

<pallas_src>
import functools

import jax
import jax.numpy as jnp
from jax.experimental import pallas as pl
from jax.experimental.pallas import tpu as pltpu


def _mlp_kernel(x_ref,
                w1_ref, b1_ref,
                w2_ref, b2_ref,
                w3_ref, b3_ref,
                w4_ref, b4_ref,
                w5_ref, b5_ref,
                o_ref):
    # Compute dtype follows the weights (f32, or bf16 on the v6e/v7x fast path).
    cdt = w1_ref.dtype

    h = x_ref[...]  # (6, TM): features on sublanes, batch tile on lanes.

    # Hidden layers: the dot emits the compute dtype (MXU accumulates in f32
    # internally for bf16 operands), and bias-add + ReLU stay in that dtype,
    # so there are no extra full-activation casts between layers.
    h = jnp.maximum(
        jnp.dot(w1_ref[...], h, preferred_element_type=cdt) + b1_ref[...], 0.0)
    h = jnp.maximum(
        jnp.dot(w2_ref[...], h, preferred_element_type=cdt) + b2_ref[...], 0.0)
    h = jnp.maximum(
        jnp.dot(w3_ref[...], h, preferred_element_type=cdt) + b3_ref[...], 0.0)
    h = jnp.maximum(
        jnp.dot(w4_ref[...], h, preferred_element_type=cdt) + b4_ref[...], 0.0)

    # Final layer: accumulate & emit in f32; (3, TM) store is lane-dense.
    out = jnp.dot(w5_ref[...], h, preferred_element_type=jnp.float32) + b5_ref[...]
    o_ref[...] = out.astype(o_ref.dtype)


def _round_up(a, m):
    return ((a + m - 1) // m) * m


@functools.partial(jax.jit, static_argnames=("tm", "compute_dtype"))
def mlp_forward(x, params, *, tm=2048, compute_dtype=jnp.float32):
    """x: (B, 6) float32.  params: list of (W, b) with W in PyTorch layout
    (out_features, in_features).  Returns (B, 3) float32."""
    B, in_dim = x.shape
    out_dim = params[-1][0].shape[0]

    # The batch tile lives on the lane axis -> force a multiple of 128.
    tm = max(128, (int(tm) // 128) * 128)
    b128 = _round_up(B, 128)
    tile = min(tm, b128)
    if b128 >= 2 * 128:
        # Keep >=2 grid steps so v7x can shard the batch across its 2 TCs.
        tile = min(tile, _round_up(pl.cdiv(b128, 2), 128))
    b_pad = _round_up(B, tile)

    # One fused XLA pass: pad the batch up to the tile multiple and transpose
    # so the batch lands on the lane (last) axis.  Padded columns only ever
    # produce values that are sliced off at the end.
    x_t = jnp.pad(x, ((0, b_pad - B), (0, 0))).T.astype(compute_dtype)  # (in_dim, b_pad)

    flat = []
    n_layers = len(params)
    for idx, (w, b) in enumerate(params):
        last = idx == n_layers - 1
        flat.append(w.astype(compute_dtype))                       # (out, in)
        # Hidden biases in the compute dtype (avoids per-layer casts);
        # final-layer bias stays f32 to match the f32 output accumulation.
        flat.append(b.reshape(-1, 1).astype(
            jnp.float32 if last else compute_dtype))               # (out, 1)

    # x^T / output tiled over the batch (lane) axis; weights & biases are
    # VMEM-resident across all grid steps (constant index_map).
    in_specs = [pl.BlockSpec((in_dim, tile), lambda i: (0, i))]
    for arr in flat:
        in_specs.append(pl.BlockSpec(arr.shape, lambda i: (0, 0)))

    flops = 2 * b_pad * (6 * 32 + 32 * 64 + 64 * 64 + 64 * 32 + 32 * 3)
    bytes_accessed = (
        x_t.size * x_t.dtype.itemsize
        + sum(a.size * a.dtype.itemsize for a in flat)
        + b_pad * out_dim * 4
    )

    out_t = pl.pallas_call(
        _mlp_kernel,
        out_shape=jax.ShapeDtypeStruct((out_dim, b_pad), jnp.float32),
        grid=(b_pad // tile,),
        in_specs=in_specs,
        out_specs=pl.BlockSpec((out_dim, tile), lambda i: (0, i)),
        compiler_params=pltpu.CompilerParams(
            dimension_semantics=("parallel",)),
        cost_estimate=pl.CostEstimate(
            flops=flops, transcendentals=0, bytes_accessed=bytes_accessed),
    )(x_t, *flat)

    # Back to the module's (B, 3) contract; tiny, one cheap XLA pass.
    return out_t[:, :B].T


def init_params(key):
    """Deterministic init mimicking PyTorch Linear default
    (uniform +/- 1/sqrt(fan_in)); weights kept in PyTorch (out, in) layout."""
    dims = [(6, 32), (32, 64), (64, 64), (64, 32), (32, 3)]
    params = []
    for (fan_in, fan_out) in dims:
        key, kw, kb = jax.random.split(key, 3)
        bound = 1.0 / jnp.sqrt(float(fan_in))
        w = jax.random.uniform(kw, (fan_out, fan_in), jnp.float32, -bound, bound)
        b = jax.random.uniform(kb, (fan_out,), jnp.float32, -bound, bound)
        params.append((w, b))
    return params


def reference_forward(x, params):
    h = x
    for i, (w, b) in enumerate(params):
        h = h @ w.T + b
        if i < len(params) - 1:
            h = jnp.maximum(h, 0.0)
    return h


if __name__ == "__main__":
    key = jax.random.PRNGKey(0)
    key, kx1, kx2 = jax.random.split(key, 3)
    params = init_params(key)

    # 1) Small batch (typical usage of this module), f32, tight tolerance.
    x_small = jax.random.normal(kx1, (8, 6), dtype=jnp.float32)
    out_small = jax.block_until_ready(mlp_forward(x_small, params))
    ref_small = reference_forward(x_small, params)
    assert out_small.shape == (8, 3), out_small.shape
    assert jnp.allclose(out_small, ref_small, atol=1e-5, rtol=1e-5), \
        "f32 small-batch mismatch vs JAX reference"

    # 2) Larger, non-tile-aligned batch: exercises a >=2-step grid + padding.
    x_big = jax.random.normal(kx2, (300, 6), dtype=jnp.float32)
    out_big = jax.block_until_ready(mlp_forward(x_big, params, tm=512))
    ref_big = reference_forward(x_big, params)
    assert out_big.shape == (300, 3), out_big.shape
    assert jnp.allclose(out_big, ref_big, atol=1e-5, rtol=1e-5), \
        "f32 tiled-batch mismatch vs JAX reference"

    # 3) bf16 MXU/VPU path (recommended default on v6e/v7x), f32 final layer.
    out_bf16 = jax.block_until_ready(
        mlp_forward(x_big, params, compute_dtype=jnp.bfloat16))
    assert out_bf16.shape == (300, 3), out_bf16.shape
    assert jnp.allclose(out_bf16, ref_big, atol=1e-1, rtol=1e-1), \
        "bf16 path mismatch vs JAX reference"

    print("KERNEL_OK")
</pallas_src>

<mosaic_0001>
module attributes {stable_mosaic.version = 11 : i64} {
  func.func @_mlp_kernel(%arg0: i32, %arg1: memref<6x128xf32, #tpu.memory_space<vmem>>, %arg2: memref<32x6xf32, #tpu.memory_space<vmem>>, %arg3: memref<32x1xf32, #tpu.memory_space<vmem>>, %arg4: memref<64x32xf32, #tpu.memory_space<vmem>>, %arg5: memref<64x1xf32, #tpu.memory_space<vmem>>, %arg6: memref<64x64xf32, #tpu.memory_space<vmem>>, %arg7: memref<64x1xf32, #tpu.memory_space<vmem>>, %arg8: memref<32x64xf32, #tpu.memory_space<vmem>>, %arg9: memref<32x1xf32, #tpu.memory_space<vmem>>, %arg10: memref<3x32xf32, #tpu.memory_space<vmem>>, %arg11: memref<3x1xf32, #tpu.memory_space<vmem>>, %arg12: memref<3x128xf32, #tpu.memory_space<vmem>>) attributes {dimension_semantics = [#tpu.dimension_semantics<parallel>], iteration_bounds = array<i64: 1>, scalar_prefetch = 0 : i64, scratch_operands = 0 : i64, tpu.core_type = #tpu.core_type<tc>, window_params = [{transform_indices = @transform_0, window_bounds = array<i64: 6, 128>}, {pipeline_mode = #tpu.pipeline_mode<synchronous>, transform_indices = @transform_1, window_bounds = array<i64: 32, 6>}, {pipeline_mode = #tpu.pipeline_mode<synchronous>, transform_indices = @transform_2, window_bounds = array<i64: 32, 1>}, {pipeline_mode = #tpu.pipeline_mode<synchronous>, transform_indices = @transform_3, window_bounds = array<i64: 64, 32>}, {pipeline_mode = #tpu.pipeline_mode<synchronous>, transform_indices = @transform_4, window_bounds = array<i64: 64, 1>}, {pipeline_mode = #tpu.pipeline_mode<synchronous>, transform_indices = @transform_5, window_bounds = array<i64: 64, 64>}, {pipeline_mode = #tpu.pipeline_mode<synchronous>, transform_indices = @transform_6, window_bounds = array<i64: 64, 1>}, {pipeline_mode = #tpu.pipeline_mode<synchronous>, transform_indices = @transform_7, window_bounds = array<i64: 32, 64>}, {pipeline_mode = #tpu.pipeline_mode<synchronous>, transform_indices = @transform_8, window_bounds = array<i64: 32, 1>}, {pipeline_mode = #tpu.pipeline_mode<synchronous>, transform_indices = @transform_9, window_bounds = array<i64: 3, 32>}, {pipeline_mode = #tpu.pipeline_mode<synchronous>, transform_indices = @transform_10, window_bounds = array<i64: 3, 1>}, {transform_indices = @transform_11, window_bounds = array<i64: 3, 128>}]} {
    %c0 = arith.constant 0 : index
    %c0_0 = arith.constant 0 : index
    %0 = vector.load %arg1[%c0, %c0_0] : memref<6x128xf32, #tpu.memory_space<vmem>>, vector<6x128xf32>
    %c0_1 = arith.constant 0 : index
    %c0_2 = arith.constant 0 : index
    %1 = vector.load %arg2[%c0_1, %c0_2] : memref<32x6xf32, #tpu.memory_space<vmem>>, vector<32x6xf32>
    %cst = arith.constant dense<0.000000e+00> : vector<32x128xf32>
    %2 = tpu.matmul %1, %0, %cst {dimension_numbers = #tpu.dot_dimension_numbers<[1], [0], [0], [1], [0, 0, 1, 1], [], []>} : vector<32x6xf32>, vector<6x128xf32>, vector<32x128xf32> -> vector<32x128xf32>
    %c0_3 = arith.constant 0 : index
    %c0_4 = arith.constant 0 : index
    %3 = vector.load %arg3[%c0_3, %c0_4] : memref<32x1xf32, #tpu.memory_space<vmem>>, vector<32x1xf32>
    %4 = vector.broadcast %3 : vector<32x1xf32> to vector<32x128xf32>
    %5 = arith.addf %2, %4 : vector<32x128xf32>
    %cst_5 = arith.constant 0.000000e+00 : f32
    %6 = vector.broadcast %cst_5 : f32 to vector<32x128xf32>
    %7 = arith.maximumf %5, %6 : vector<32x128xf32>
    %c0_6 = arith.constant 0 : index
    %c0_7 = arith.constant 0 : index
    %8 = vector.load %arg4[%c0_6, %c0_7] : memref<64x32xf32, #tpu.memory_space<vmem>>, vector<64x32xf32>
    %cst_8 = arith.constant dense<0.000000e+00> : vector<64x128xf32>
    %9 = tpu.matmul %8, %7, %cst_8 {dimension_numbers = #tpu.dot_dimension_numbers<[1], [0], [0], [1], [0, 0, 1, 1], [], []>} : vector<64x32xf32>, vector<32x128xf32>, vector<64x128xf32> -> vector<64x128xf32>
    %c0_9 = arith.constant 0 : index
    %c0_10 = arith.constant 0 : index
    %10 = vector.load %arg5[%c0_9, %c0_10] : memref<64x1xf32, #tpu.memory_space<vmem>>, vector<64x1xf32>
    %11 = vector.broadcast %10 : vector<64x1xf32> to vector<64x128xf32>
    %12 = arith.addf %9, %11 : vector<64x128xf32>
    %cst_11 = arith.constant 0.000000e+00 : f32
    %13 = vector.broadcast %cst_11 : f32 to vector<64x128xf32>
    %14 = arith.maximumf %12, %13 : vector<64x128xf32>
    %c0_12 = arith.constant 0 : index
    %c0_13 = arith.constant 0 : index
    %15 = vector.load %arg6[%c0_12, %c0_13] : memref<64x64xf32, #tpu.memory_space<vmem>>, vector<64x64xf32>
    %cst_14 = arith.constant dense<0.000000e+00> : vector<64x128xf32>
    %16 = tpu.matmul %15, %14, %cst_14 {dimension_numbers = #tpu.dot_dimension_numbers<[1], [0], [0], [1], [0, 0, 1, 1], [], []>} : vector<64x64xf32>, vector<64x128xf32>, vector<64x128xf32> -> vector<64x128xf32>
    %c0_15 = arith.constant 0 : index
    %c0_16 = arith.constant 0 : index
    %17 = vector.load %arg7[%c0_15, %c0_16] : memref<64x1xf32, #tpu.memory_space<vmem>>, vector<64x1xf32>
    %18 = vector.broadcast %17 : vector<64x1xf32> to vector<64x128xf32>
    %19 = arith.addf %16, %18 : vector<64x128xf32>
    %cst_17 = arith.constant 0.000000e+00 : f32
    %20 = vector.broadcast %cst_17 : f32 to vector<64x128xf32>
    %21 = arith.maximumf %19, %20 : vector<64x128xf32>
    %c0_18 = arith.constant 0 : index
    %c0_19 = arith.constant 0 : index
    %22 = vector.load %arg8[%c0_18, %c0_19] : memref<32x64xf32, #tpu.memory_space<vmem>>, vector<32x64xf32>
    %cst_20 = arith.constant dense<0.000000e+00> : vector<32x128xf32>
    %23 = tpu.matmul %22, %21, %cst_20 {dimension_numbers = #tpu.dot_dimension_numbers<[1], [0], [0], [1], [0, 0, 1, 1], [], []>} : vector<32x64xf32>, vector<64x128xf32>, vector<32x128xf32> -> vector<32x128xf32>
    %c0_21 = arith.constant 0 : index
    %c0_22 = arith.constant 0 : index
    %24 = vector.load %arg9[%c0_21, %c0_22] : memref<32x1xf32, #tpu.memory_space<vmem>>, vector<32x1xf32>
    %25 = vector.broadcast %24 : vector<32x1xf32> to vector<32x128xf32>
    %26 = arith.addf %23, %25 : vector<32x128xf32>
    %cst_23 = arith.constant 0.000000e+00 : f32
    %27 = vector.broadcast %cst_23 : f32 to vector<32x128xf32>
    %28 = arith.maximumf %26, %27 : vector<32x128xf32>
    %c0_24 = arith.constant 0 : index
    %c0_25 = arith.constant 0 : index
    %29 = vector.load %arg10[%c0_24, %c0_25] : memref<3x32xf32, #tpu.memory_space<vmem>>, vector<3x32xf32>
    %cst_26 = arith.constant dense<0.000000e+00> : vector<3x128xf32>
    %30 = tpu.matmul %29, %28, %cst_26 {dimension_numbers = #tpu.dot_dimension_numbers<[1], [0], [0], [1], [0, 0, 1, 1], [], []>} : vector<3x32xf32>, vector<32x128xf32>, vector<3x128xf32> -> vector<3x128xf32>
    %c0_27 = arith.constant 0 : index
    %c0_28 = arith.constant 0 : index
    %31 = vector.load %arg11[%c0_27, %c0_28] : memref<3x1xf32, #tpu.memory_space<vmem>>, vector<3x1xf32>
    %32 = vector.broadcast %31 : vector<3x1xf32> to vector<3x128xf32>
    %33 = arith.addf %30, %32 : vector<3x128xf32>
    %c0_29 = arith.constant 0 : index
    %c0_30 = arith.constant 0 : index
    %34 = vector.load %arg12[%c0_29, %c0_30] : memref<3x128xf32, #tpu.memory_space<vmem>>, vector<3x128xf32>
    tpu.vector_store %arg12[%c0_29, %c0_30], %33 {strides = array<i32>} : memref<3x128xf32, #tpu.memory_space<vmem>>, vector<3x128xf32>,
    return
  }
  func.func @transform_0(%arg0: i32) -> (i32, i32) {
    %c0_i32 = arith.constant 0 : i32
    %c0_i32_0 = arith.constant 0 : i32
    return %c0_i32, %arg0 : i32, i32
  }
  func.func @transform_1(%arg0: i32) -> (i32, i32) {
    %c0_i32 = arith.constant 0 : i32
    %c0_i32_0 = arith.constant 0 : i32
    %c0_i32_1 = arith.constant 0 : i32
    return %c0_i32, %c0_i32_0 : i32, i32
  }
  func.func @transform_2(%arg0: i32) -> (i32, i32) {
    %c0_i32 = arith.constant 0 : i32
    %c0_i32_0 = arith.constant 0 : i32
    %c0_i32_1 = arith.constant 0 : i32
    return %c0_i32, %c0_i32_0 : i32, i32
  }
  func.func @transform_3(%arg0: i32) -> (i32, i32) {
    %c0_i32 = arith.constant 0 : i32
    %c0_i32_0 = arith.constant 0 : i32
    %c0_i32_1 = arith.constant 0 : i32
    return %c0_i32, %c0_i32_0 : i32, i32
  }
  func.func @transform_4(%arg0: i32) -> (i32, i32) {
    %c0_i32 = arith.constant 0 : i32
    %c0_i32_0 = arith.constant 0 : i32
    %c0_i32_1 = arith.constant 0 : i32
    return %c0_i32, %c0_i32_0 : i32, i32
  }
  func.func @transform_5(%arg0: i32) -> (i32, i32) {
    %c0_i32 = arith.constant 0 : i32
    %c0_i32_0 = arith.constant 0 : i32
    %c0_i32_1 = arith.constant 0 : i32
    return %c0_i32, %c0_i32_0 : i32, i32
  }
  func.func @transform_6(%arg0: i32) -> (i32, i32) {
    %c0_i32 = arith.constant 0 : i32
    %c0_i32_0 = arith.constant 0 : i32
    %c0_i32_1 = arith.constant 0 : i32
    return %c0_i32, %c0_i32_0 : i32, i32
  }
  func.func @transform_7(%arg0: i32) -> (i32, i32) {
    %c0_i32 = arith.constant 0 : i32
    %c0_i32_0 = arith.constant 0 : i32
    %c0_i32_1 = arith.constant 0 : i32
    return %c0_i32, %c0_i32_0 : i32, i32
  }
  func.func @transform_8(%arg0: i32) -> (i32, i32) {
    %c0_i32 = arith.constant 0 : i32
    %c0_i32_0 = arith.constant 0 : i32
    %c0_i32_1 = arith.constant 0 : i32
    return %c0_i32, %c0_i32_0 : i32, i32
  }
  func.func @transform_9(%arg0: i32) -> (i32, i32) {
    %c0_i32 = arith.constant 0 : i32
    %c0_i32_0 = arith.constant 0 : i32
    %c0_i32_1 = arith.constant 0 : i32
    return %c0_i32, %c0_i32_0 : i32, i32
  }
  func.func @transform_10(%arg0: i32) -> (i32, i32) {
    %c0_i32 = arith.constant 0 : i32
    %c0_i32_0 = arith.constant 0 : i32
    %c0_i32_1 = arith.constant 0 : i32
    return %c0_i32, %c0_i32_0 : i32, i32
  }
  func.func @transform_11(%arg0: i32) -> (i32, i32) {
    %c0_i32 = arith.constant 0 : i32
    %c0_i32_0 = arith.constant 0 : i32
    return %c0_i32, %arg0 : i32, i32
  }
}

</mosaic_0001>

<llo_original>
// kernel: mlp_forward.1
$region0: #{mlp_forward.1}
  #allocation0 [shape = 'u32[]', space=smem, size = 0x4, offset = 0x4, fixed_abs, tag = 'smem constant byte address 0x4 - core index']
  #allocation1 [shape = 'u32[144,128]{1,0:T(1,128)}', space=vmem, size = 0x12000, scoped, tag = 'internal scratch']
  %s0 = inlined_call_operand.vmem [shape: f32[6,128], index: 0, kind: input, shape index: {}]
  %s1 = inlined_call_operand.vmem [shape: f32[32,6], index: 1, kind: input, shape index: {}]
  %s2 = inlined_call_operand.vmem [shape: f32[32,1], index: 2, kind: input, shape index: {}]
  %s3 = inlined_call_operand.vmem [shape: f32[64,32], index: 3, kind: input, shape index: {}]
  %s4 = inlined_call_operand.vmem [shape: f32[64,1], index: 4, kind: input, shape index: {}]
  %s5 = inlined_call_operand.vmem [shape: f32[64,64], index: 5, kind: input, shape index: {}]
  %s6 = inlined_call_operand.vmem [shape: f32[64,1], index: 6, kind: input, shape index: {}]
  %s7 = inlined_call_operand.vmem [shape: f32[32,64], index: 7, kind: input, shape index: {}]
  %s8 = inlined_call_operand.vmem [shape: f32[32,1], index: 8, kind: input, shape index: {}]
  %s9 = inlined_call_operand.vmem [shape: f32[3,32], index: 9, kind: input, shape index: {}]
  %s10 = inlined_call_operand.vmem [shape: f32[3,1], index: 10, kind: input, shape index: {}]
  %s11 = inlined_call_operand.vmem [shape: f32[3,128], index: 11, kind: output, shape index: {}]
  %s12 = sld [smem:[#allocation0]]
  $region54: #{mlp_forward.1} parent=0
    _
  %s14 = ssub.s32 1, %s12
  %s15 = scalar_select 0, %s14, %s12
  // Predicated region
  $region2: #{mlp_forward.1} parent=0 // pred_check
    _
  $region3: #{mlp_forward.1} parent=0 // pred_check_branch
    %17 = sbr.rel (0) target = $region5
  $region4: #{mlp_forward.1} parent=0 // pred_region
    _
  $region5: #{mlp_forward.1} parent=0 // pred_fallthru
    _
  // Predicated region
  $region6: #{mlp_forward.1} parent=0 // pred_check
    _
  $region7: #{mlp_forward.1} parent=0 // pred_check_branch
    %19 = sbr.rel (0) target = $region9
  $region8: #{mlp_forward.1} parent=0 // pred_region
    _
  $region9: #{mlp_forward.1} parent=0 // pred_fallthru
    _
  // Predicated region
  $region10: #{mlp_forward.1} parent=0 // pred_check
    _
  $region11: #{mlp_forward.1} parent=0 // pred_check_branch
    %21 = sbr.rel (0) target = $region13
  $region12: #{mlp_forward.1} parent=0 // pred_region
    _
  $region13: #{mlp_forward.1} parent=0 // pred_fallthru
    _
  // Predicated region
  $region14: #{mlp_forward.1} parent=0 // pred_check
    _
  $region15: #{mlp_forward.1} parent=0 // pred_check_branch
    %23 = sbr.rel (0) target = $region17
  $region16: #{mlp_forward.1} parent=0 // pred_region
    _
  $region17: #{mlp_forward.1} parent=0 // pred_fallthru
    _
  // Predicated region
  $region18: #{mlp_forward.1} parent=0 // pred_check
    _
  $region19: #{mlp_forward.1} parent=0 // pred_check_branch
    %25 = sbr.rel (0) target = $region21
  $region20: #{mlp_forward.1} parent=0 // pred_region
    _
  $region21: #{mlp_forward.1} parent=0 // pred_fallthru
    _
  // Predicated region
  $region22: #{mlp_forward.1} parent=0 // pred_check
    _
  $region23: #{mlp_forward.1} parent=0 // pred_check_branch
    %27 = sbr.rel (0) target = $region25
  $region24: #{mlp_forward.1} parent=0 // pred_region
    _
  $region25: #{mlp_forward.1} parent=0 // pred_fallthru
    _
  // Predicated region
  $region26: #{mlp_forward.1} parent=0 // pred_check
    _
  $region27: #{mlp_forward.1} parent=0 // pred_check_branch
    %29 = sbr.rel (0) target = $region29
  $region28: #{mlp_forward.1} parent=0 // pred_region
    _
  $region29: #{mlp_forward.1} parent=0 // pred_fallthru
    _
  // Predicated region
  $region30: #{mlp_forward.1} parent=0 // pred_check
    _
  $region31: #{mlp_forward.1} parent=0 // pred_check_branch
    %31 = sbr.rel (0) target = $region33
  $region32: #{mlp_forward.1} parent=0 // pred_region
    _
  $region33: #{mlp_forward.1} parent=0 // pred_fallthru
    _
  // Predicated region
  $region34: #{mlp_forward.1} parent=0 // pred_check
    _
  $region35: #{mlp_forward.1} parent=0 // pred_check_branch
    %33 = sbr.rel (0) target = $region37
  $region36: #{mlp_forward.1} parent=0 // pred_region
    _
  $region37: #{mlp_forward.1} parent=0 // pred_fallthru
    _
  // Predicated region
  $region38: #{mlp_forward.1} parent=0 // pred_check
    _
  $region39: #{mlp_forward.1} parent=0 // pred_check_branch
    %35 = sbr.rel (0) target = $region41
  $region40: #{mlp_forward.1} parent=0 // pred_region
    _
  $region41: #{mlp_forward.1} parent=0 // pred_fallthru
    _
  // Predicated region
  $region42: #{mlp_forward.1} parent=0 // pred_check
    _
  $region43: #{mlp_forward.1} parent=0 // pred_check_branch
    %37 = sbr.rel (0) target = $region45
  $region44: #{mlp_forward.1} parent=0 // pred_region
    _
  $region45: #{mlp_forward.1} parent=0 // pred_fallthru
    _
  %v38 = vld [vmem:[%s0] sm:$0x3f]
  %v39 = vld [vmem:[%s1] sm:$0xff]
  %v40 = vld [vmem:[%s1 + $0x8] sm:$0xff]
  %v41 = vld [vmem:[%s1 + $0x10] sm:$0xff]
  %v42 = vld [vmem:[%s1 + $0x18] sm:$0xff]
  %v43 = vld [vmem:[%s2] sm:$0xff]
  %v44 = vld [vmem:[%s2 + $0x8] sm:$0xff]
  %v45 = vld [vmem:[%s2 + $0x10] sm:$0xff]
  %v46 = vld [vmem:[%s2 + $0x18] sm:$0xff]
  %48 = vset.pattern.permute.xlu0 0
  %49 = vperm.xlu0 %48, %v43
  %v50 = vpop.permute.xlu0 %49
  %53 = vset.pattern.permute.xlu0 0
  %54 = vperm.xlu0 %53, %v44
  %v55 = vpop.permute.xlu0 %54
  %58 = vset.pattern.permute.xlu0 0
  %59 = vperm.xlu0 %58, %v45
  %v60 = vpop.permute.xlu0 %59
  %63 = vset.pattern.permute.xlu0 0
  %64 = vperm.xlu0 %63, %v46
  %v65 = vpop.permute.xlu0 %64
  %vm67 = vcmask 48128
  %v69 = vsel %vm67, %v39, 0
  %v72 = vsel %vm67, %v40, 0
  %v75 = vsel %vm67, %v41, 0
  %v78 = vsel %vm67, %v42, 0
  %vm80 = vcmask 1045504
  %v82 = vsel %vm80, %v38, 0
  %84 = vmatprep.subr.mxu0 0.0
  %85 = vmatpush1.msra.mxu0 %v82
  %86 = vmatprep.subr.mxu0 0.0
  %87 = vmatpush1.msra.mxu0 0.0
  %88 = vmatprep.subr.mxu0 0.0
  %89 = vmatpush1.msra.mxu0 0.0
  %90 = vmatprep.subr.mxu0 0.0
  %91 = vmatpush1.msra.mxu0 0.0
  %92 = vmatprep.subr.mxu0 0.0
  %93 = vmatpush1.msra.mxu0 0.0
  %94 = vmatprep.subr.mxu0 0.0
  %95 = vmatpush1.msra.mxu0 0.0
  %96 = vmatprep.subr.mxu0 0.0
  %97 = vmatpush1.msra.mxu0 0.0
  %98 = vmatprep.subr.mxu0 0.0
  %99 = vmatpush1.msra.mxu0 0.0
  %100 = vmatprep.subr.mxu0 0.0
  %101 = vmatpush1.msra.mxu0 0.0
  %102 = vmatprep.subr.mxu0 0.0
  %103 = vmatpush1.msra.mxu0 0.0
  %104 = vmatprep.subr.mxu0 0.0
  %105 = vmatpush1.msra.mxu0 0.0
  %106 = vmatprep.subr.mxu0 0.0
  %107 = vmatpush1.msra.mxu0 0.0
  %108 = vmatprep.subr.mxu0 0.0
  %109 = vmatpush1.msra.mxu0 0.0
  %110 = vmatprep.subr.mxu0 0.0
  %111 = vmatpush1.msra.mxu0 0.0
  %112 = vmatprep.subr.mxu0 0.0
  %113 = vmatpush1.msra.mxu0 0.0
  %114 = vmatprep.subr.mxu0 0.0
  %115 = vmatpush1.msra.mxu0 0.0
  %116 = vmatprep.subr.mxu0 0.0
  %117 = vmatpush1.msra.mxu0 0.0
  %118 = vmatprep.subr.mxu0 0.0
  %119 = vmatpush1.msra.mxu0 0.0
  %120 = vmatprep.subr.mxu0 0.0
  %121 = vmatpush1.msra.mxu0 0.0
  %122 = vmatprep.subr.mxu0 0.0
  %123 = vmatpush1.msra.mxu0 0.0
  %124 = vmatprep.subr.mxu0 0.0
  %125 = vmatpush1.msra.mxu0 0.0
  %126 = vmatprep.subr.mxu0 0.0
  %127 = vmatpush1.msra.mxu0 0.0
  %128 = vmatprep.subr.mxu0 0.0
  %129 = vmatpush1.msra.mxu0 0.0
  %130 = vmatprep.subr.mxu0 0.0
  %131 = vmatpush1.msra.mxu0 0.0
  %132 = vmatprep.subr.mxu0 0.0
  %133 = vmatpush1.msra.mxu0 0.0
  %134 = vmatprep.subr.mxu0 0.0
  %135 = vmatpush1.msra.mxu0 0.0
  %136 = vmatprep.subr.mxu0 0.0
  %137 = vmatpush1.msra.mxu0 0.0
  %138 = vmatprep.subr.mxu0 0.0
  %139 = vmatpush1.msra.mxu0 0.0
  %140 = vmatprep.subr.mxu0 0.0
  %141 = vmatpush1.msra.mxu0 0.0
  %142 = vmatprep.subr.mxu0 0.0
  %143 = vmatpush1.msra.mxu0 0.0
  %144 = vmatprep.subr.mxu0 0.0
  %145 = vmatpush1.msra.mxu0 0.0
  %146 = vmatprep.subr.mxu0 0.0
  %147 = vmatpush1.msra.mxu0 0.0
  %148 = vmatprep.mubr.f32.mxu0 0.0
  %149 = vmatmul.mubr.f32.gmra.mrb[0].mxu0 %v69
  %v150 = vpop.f32.mrb[0].mxu0
  %v151 = vadd.f32 %v50, %v150
  %v152 = vpop.f32.mrb[0].mxu0
  %153 = vmatprep.mubr.f32.mxu0 0.0
  %154 = vmatmul.mubr.f32.gmra.mrb[0].mxu0 %v72
  %v155 = vpop.f32.mrb[0].mxu0
  %v156 = vadd.f32 %v55, %v155
  %v157 = vpop.f32.mrb[0].mxu0
  %158 = vmatprep.mubr.f32.mxu0 0.0
  %159 = vmatmul.mubr.f32.gmra.mrb[0].mxu0 %v75
  %v160 = vpop.f32.mrb[0].mxu0
  %v161 = vadd.f32 %v60, %v160
  %v162 = vpop.f32.mrb[0].mxu0
  %163 = vmatprep.mubr.f32.mxu0 0.0
  %164 = vmatmul.mubr.f32.gmra.mrb[0].mxu0 %v78
  %v165 = vpop.f32.mrb[0].mxu0
  %v166 = vadd.f32 %v65, %v165
  %v167 = vpop.f32.mrb[0].mxu0
  %168 = vdwg.mxu0
  %v169 = vmax.f32 %v151, 0.0
  %v170 = vmax.f32 %v156, 0.0
  %v171 = vmax.f32 %v161, 0.0
  %v172 = vmax.f32 %v166, 0.0
  %v173 = vld [vmem:[%s3] sm:$0xff]
  %v174 = vld [vmem:[%s3 + $0x8] sm:$0xff]
  %v175 = vld [vmem:[%s3 + $0x10] sm:$0xff]
  %v176 = vld [vmem:[%s3 + $0x18] sm:$0xff]
  %v177 = vld [vmem:[%s3 + $0x20] sm:$0xff]
  %v178 = vld [vmem:[%s3 + $0x28] sm:$0xff]
  %v179 = vld [vmem:[%s3 + $0x30] sm:$0xff]
  %v180 = vld [vmem:[%s3 + $0x38] sm:$0xff]
  %v181 = vld [vmem:[%s4] sm:$0xff]
  %v182 = vld [vmem:[%s4 + $0x8] sm:$0xff]
  %v183 = vld [vmem:[%s4 + $0x10] sm:$0xff]
  %v184 = vld [vmem:[%s4 + $0x18] sm:$0xff]
  %v185 = vld [vmem:[%s4 + $0x20] sm:$0xff]
  %v186 = vld [vmem:[%s4 + $0x28] sm:$0xff]
  %v187 = vld [vmem:[%s4 + $0x30] sm:$0xff]
  %v188 = vld [vmem:[%s4 + $0x38] sm:$0xff]
  %190 = vset.pattern.permute.xlu0 0
  %191 = vperm.xlu0 %190, %v181
  %v192 = vpop.permute.xlu0 %191
  %195 = vset.pattern.permute.xlu0 0
  %196 = vperm.xlu0 %195, %v182
  %v197 = vpop.permute.xlu0 %196
  %200 = vset.pattern.permute.xlu0 0
  %201 = vperm.xlu0 %200, %v183
  %v202 = vpop.permute.xlu0 %201
  %205 = vset.pattern.permute.xlu0 0
  %206 = vperm.xlu0 %205, %v184
  %v207 = vpop.permute.xlu0 %206
  %210 = vset.pattern.permute.xlu0 0
  %211 = vperm.xlu0 %210, %v185
  %v212 = vpop.permute.xlu0 %211
  %215 = vset.pattern.permute.xlu0 0
  %216 = vperm.xlu0 %215, %v186
  %v217 = vpop.permute.xlu0 %216
  %220 = vset.pattern.permute.xlu0 0
  %221 = vperm.xlu0 %220, %v187
  %v222 = vpop.permute.xlu0 %221
  %225 = vset.pattern.permute.xlu0 0
  %226 = vperm.xlu0 %225, %v188
  %v227 = vpop.permute.xlu0 %226
  %vm229 = vcmask 261120
  %v231 = vsel %vm229, %v173, 0
  %v234 = vsel %vm229, %v174, 0
  %v237 = vsel %vm229, %v175, 0
  %v240 = vsel %vm229, %v176, 0
  %v243 = vsel %vm229, %v177, 0
  %v246 = vsel %vm229, %v178, 0
  %v249 = vsel %vm229, %v179, 0
  %v252 = vsel %vm229, %v180, 0
  %254 = vmatprep.subr.mxu0 0.0
  %255 = vmatpush1.msra.mxu0 %v169
  %256 = vmatprep.subr.mxu0 0.0
  %257 = vmatpush1.msra.mxu0 %v170
  %258 = vmatprep.subr.mxu0 0.0
  %259 = vmatpush1.msra.mxu0 %v171
  %260 = vmatprep.subr.mxu0 0.0
  %261 = vmatpush1.msra.mxu0 %v172
  %262 = vmatprep.subr.mxu0 0.0
  %263 = vmatpush1.msra.mxu0 0.0
  %264 = vmatprep.subr.mxu0 0.0
  %265 = vmatpush1.msra.mxu0 0.0
  %266 = vmatprep.subr.mxu0 0.0
  %267 = vmatpush1.msra.mxu0 0.0
  %268 = vmatprep.subr.mxu0 0.0
  %269 = vmatpush1.msra.mxu0 0.0
  %270 = vmatprep.subr.mxu0 0.0
  %271 = vmatpush1.msra.mxu0 0.0
  %272 = vmatprep.subr.mxu0 0.0
  %273 = vmatpush1.msra.mxu0 0.0
  %274 = vmatprep.subr.mxu0 0.0
  %275 = vmatpush1.msra.mxu0 0.0
  %276 = vmatprep.subr.mxu0 0.0
  %277 = vmatpush1.msra.mxu0 0.0
  %278 = vmatprep.subr.mxu0 0.0
  %279 = vmatpush1.msra.mxu0 0.0
  %280 = vmatprep.subr.mxu0 0.0
  %281 = vmatpush1.msra.mxu0 0.0
  %282 = vmatprep.subr.mxu0 0.0
  %283 = vmatpush1.msra.mxu0 0.0
  %284 = vmatprep.subr.mxu0 0.0
  %285 = vmatpush1.msra.mxu0 0.0
  %286 = vmatprep.subr.mxu0 0.0
  %287 = vmatpush1.msra.mxu0 0.0
  %288 = vmatprep.subr.mxu0 0.0
  %289 = vmatpush1.msra.mxu0 0.0
  %290 = vmatprep.subr.mxu0 0.0
  %291 = vmatpush1.msra.mxu0 0.0
  %292 = vmatprep.subr.mxu0 0.0
  %293 = vmatpush1.msra.mxu0 0.0
  %294 = vmatprep.subr.mxu0 0.0
  %295 = vmatpush1.msra.mxu0 0.0
  %296 = vmatprep.subr.mxu0 0.0
  %297 = vmatpush1.msra.mxu0 0.0
  %298 = vmatprep.subr.mxu0 0.0
  %299 = vmatpush1.msra.mxu0 0.0
  %300 = vmatprep.subr.mxu0 0.0
  %301 = vmatpush1.msra.mxu0 0.0
  %302 = vmatprep.subr.mxu0 0.0
  %303 = vmatpush1.msra.mxu0 0.0
  %304 = vmatprep.subr.mxu0 0.0
  %305 = vmatpush1.msra.mxu0 0.0
  %306 = vmatprep.subr.mxu0 0.0
  %307 = vmatpush1.msra.mxu0 0.0
  %308 = vmatprep.subr.mxu0 0.0
  %309 = vmatpush1.msra.mxu0 0.0
  %310 = vmatprep.subr.mxu0 0.0
  %311 = vmatpush1.msra.mxu0 0.0
  %312 = vmatprep.subr.mxu0 0.0
  %313 = vmatpush1.msra.mxu0 0.0
  %314 = vmatprep.subr.mxu0 0.0
  %315 = vmatpush1.msra.mxu0 0.0
  %316 = vmatprep.subr.mxu0 0.0
  %317 = vmatpush1.msra.mxu0 0.0
  %318 = vmatprep.mubr.f32.mxu0 0.0
  %319 = vmatmul.mubr.f32.gmra.mrb[0].mxu0 %v231
  %v320 = vpop.f32.mrb[0].mxu0
  %v321 = vadd.f32 %v192, %v320
  %v322 = vpop.f32.mrb[0].mxu0
  %323 = vmatprep.mubr.f32.mxu0 0.0
  %324 = vmatmul.mubr.f32.gmra.mrb[0].mxu0 %v234
  %v325 = vpop.f32.mrb[0].mxu0
  %v326 = vadd.f32 %v197, %v325
  %v327 = vpop.f32.mrb[0].mxu0
  %328 = vmatprep.mubr.f32.mxu0 0.0
  %329 = vmatmul.mubr.f32.gmra.mrb[0].mxu0 %v237
  %v330 = vpop.f32.mrb[0].mxu0
  %v331 = vadd.f32 %v202, %v330
  %v332 = vpop.f32.mrb[0].mxu0
  %333 = vmatprep.mubr.f32.mxu0 0.0
  %334 = vmatmul.mubr.f32.gmra.mrb[0].mxu0 %v240
  %v335 = vpop.f32.mrb[0].mxu0
  %v336 = vadd.f32 %v207, %v335
  %v337 = vpop.f32.mrb[0].mxu0
  %338 = vmatprep.mubr.f32.mxu0 0.0
  %339 = vmatmul.mubr.f32.gmra.mrb[0].mxu0 %v243
  %v340 = vpop.f32.mrb[0].mxu0
  %v341 = vadd.f32 %v212, %v340
  %v342 = vpop.f32.mrb[0].mxu0
  %343 = vmatprep.mubr.f32.mxu0 0.0
  %344 = vmatmul.mubr.f32.gmra.mrb[0].mxu0 %v246
  %v345 = vpop.f32.mrb[0].mxu0
  %v346 = vadd.f32 %v217, %v345
  %v347 = vpop.f32.mrb[0].mxu0
  %348 = vmatprep.mubr.f32.mxu0 0.0
  %349 = vmatmul.mubr.f32.gmra.mrb[0].mxu0 %v249
  %v350 = vpop.f32.mrb[0].mxu0
  %v351 = vadd.f32 %v222, %v350
  %v352 = vpop.f32.mrb[0].mxu0
  %353 = vmatprep.mubr.f32.mxu0 0.0
  %354 = vmatmul.mubr.f32.gmra.mrb[0].mxu0 %v252
  %v355 = vpop.f32.mrb[0].mxu0
  %v356 = vadd.f32 %v227, %v355
  %v357 = vpop.f32.mrb[0].mxu0
  %358 = vdwg.mxu0
  %v359 = vmax.f32 %v321, 0.0
  %v360 = vmax.f32 %v326, 0.0
  %v361 = vmax.f32 %v331, 0.0
  %v362 = vmax.f32 %v336, 0.0
  %v363 = vmax.f32 %v341, 0.0
  %v364 = vmax.f32 %v346, 0.0
  %v365 = vmax.f32 %v351, 0.0
  %v366 = vmax.f32 %v356, 0.0
  %v367 = vld [vmem:[%s5] sm:$0xff]
  %v368 = vld [vmem:[%s5 + $0x8] sm:$0xff]
  %v369 = vld [vmem:[%s5 + $0x10] sm:$0xff]
  %v370 = vld [vmem:[%s5 + $0x18] sm:$0xff]
  %v371 = vld [vmem:[%s5 + $0x20] sm:$0xff]
  %v372 = vld [vmem:[%s5 + $0x28] sm:$0xff]
  %v373 = vld [vmem:[%s5 + $0x30] sm:$0xff]
  %v374 = vld [vmem:[%s5 + $0x38] sm:$0xff]
  %v375 = vld [vmem:[%s6] sm:$0xff]
  %v376 = vld [vmem:[%s6 + $0x8] sm:$0xff]
  %v377 = vld [vmem:[%s6 + $0x10] sm:$0xff]
  %v378 = vld [vmem:[%s6 + $0x18] sm:$0xff]
  %v379 = vld [vmem:[%s6 + $0x20] sm:$0xff]
  %v380 = vld [vmem:[%s6 + $0x28] sm:$0xff]
  %v381 = vld [vmem:[%s6 + $0x30] sm:$0xff]
  %v382 = vld [vmem:[%s6 + $0x38] sm:$0xff]
  %384 = vset.pattern.permute.xlu0 0
  %385 = vperm.xlu0 %384, %v375
  %v386 = vpop.permute.xlu0 %385
  %389 = vset.pattern.permute.xlu0 0
  %390 = vperm.xlu0 %389, %v376
  %v391 = vpop.permute.xlu0 %390
  %394 = vset.pattern.permute.xlu0 0
  %395 = vperm.xlu0 %394, %v377
  %v396 = vpop.permute.xlu0 %395
  %399 = vset.pattern.permute.xlu0 0
  %400 = vperm.xlu0 %399, %v378
  %v401 = vpop.permute.xlu0 %400
  %404 = vset.pattern.permute.xlu0 0
  %405 = vperm.xlu0 %404, %v379
  %v406 = vpop.permute.xlu0 %405
  %409 = vset.pattern.permute.xlu0 0
  %410 = vperm.xlu0 %409, %v380
  %v411 = vpop.permute.xlu0 %410
  %414 = vset.pattern.permute.xlu0 0
  %415 = vperm.xlu0 %414, %v381
  %v416 = vpop.permute.xlu0 %415
  %419 = vset.pattern.permute.xlu0 0
  %420 = vperm.xlu0 %419, %v382
  %v421 = vpop.permute.xlu0 %420
  %vm423 = vcmask 523264
  %v425 = vsel %vm423, %v367, 0
  %v428 = vsel %vm423, %v368, 0
  %v431 = vsel %vm423, %v369, 0
  %v434 = vsel %vm423, %v370, 0
  %v437 = vsel %vm423, %v371, 0
  %v440 = vsel %vm423, %v372, 0
  %v443 = vsel %vm423, %v373, 0
  %v446 = vsel %vm423, %v374, 0
  %448 = vmatprep.subr.mxu0 0.0
  %449 = vmatpush1.msra.mxu0 %v359
  %450 = vmatprep.subr.mxu0 0.0
  %451 = vmatpush1.msra.mxu0 %v360
  %452 = vmatprep.subr.mxu0 0.0
  %453 = vmatpush1.msra.mxu0 %v361
  %454 = vmatprep.subr.mxu0 0.0
  %455 = vmatpush1.msra.mxu0 %v362
  %456 = vmatprep.subr.mxu0 0.0
  %457 = vmatpush1.msra.mxu0 %v363
  %458 = vmatprep.subr.mxu0 0.0
  %459 = vmatpush1.msra.mxu0 %v364
  %460 = vmatprep.subr.mxu0 0.0
  %461 = vmatpush1.msra.mxu0 %v365
  %462 = vmatprep.subr.mxu0 0.0
  %463 = vmatpush1.msra.mxu0 %v366
  %464 = vmatprep.subr.mxu0 0.0
  %465 = vmatpush1.msra.mxu0 0.0
  %466 = vmatprep.subr.mxu0 0.0
  %467 = vmatpush1.msra.mxu0 0.0
  %468 = vmatprep.subr.mxu0 0.0
  %469 = vmatpush1.msra.mxu0 0.0
  %470 = vmatprep.subr.mxu0 0.0
  %471 = vmatpush1.msra.mxu0 0.0
  %472 = vmatprep.subr.mxu0 0.0
  %473 = vmatpush1.msra.mxu0 0.0
  %474 = vmatprep.subr.mxu0 0.0
  %475 = vmatpush1.msra.mxu0 0.0
  %476 = vmatprep.subr.mxu0 0.0
  %477 = vmatpush1.msra.mxu0 0.0
  %478 = vmatprep.subr.mxu0 0.0
  %479 = vmatpush1.msra.mxu0 0.0
  %480 = vmatprep.subr.mxu0 0.0
  %481 = vmatpush1.msra.mxu0 0.0
  %482 = vmatprep.subr.mxu0 0.0
  %483 = vmatpush1.msra.mxu0 0.0
  %484 = vmatprep.subr.mxu0 0.0
  %485 = vmatpush1.msra.mxu0 0.0
  %486 = vmatprep.subr.mxu0 0.0
  %487 = vmatpush1.msra.mxu0 0.0
  %488 = vmatprep.subr.mxu0 0.0
  %489 = vmatpush1.msra.mxu0 0.0
  %490 = vmatprep.subr.mxu0 0.0
  %491 = vmatpush1.msra.mxu0 0.0
  %492 = vmatprep.subr.mxu0 0.0
  %493 = vmatpush1.msra.mxu0 0.0
  %494 = vmatprep.subr.mxu0 0.0
  %495 = vmatpush1.msra.mxu0 0.0
  %496 = vmatprep.subr.mxu0 0.0
  %497 = vmatpush1.msra.mxu0 0.0
  %498 = vmatprep.subr.mxu0 0.0
  %499 = vmatpush1.msra.mxu0 0.0
  %500 = vmatprep.subr.mxu0 0.0
  %501 = vmatpush1.msra.mxu0 0.0
  %502 = vmatprep.subr.mxu0 0.0
  %503 = vmatpush1.msra.mxu0 0.0
  %504 = vmatprep.subr.mxu0 0.0
  %505 = vmatpush1.msra.mxu0 0.0
  %506 = vmatprep.subr.mxu0 0.0
  %507 = vmatpush1.msra.mxu0 0.0
  %508 = vmatprep.subr.mxu0 0.0
  %509 = vmatpush1.msra.mxu0 0.0
  %510 = vmatprep.subr.mxu0 0.0
  %511 = vmatpush1.msra.mxu0 0.0
  %512 = vmatprep.mubr.f32.mxu0 0.0
  %513 = vmatmul.mubr.f32.gmra.mrb[0].mxu0 %v425
  %v514 = vpop.f32.mrb[0].mxu0
  %v515 = vadd.f32 %v386, %v514
  %v516 = vpop.f32.mrb[0].mxu0
  %517 = vmatprep.mubr.f32.mxu0 0.0
  %518 = vmatmul.mubr.f32.gmra.mrb[0].mxu0 %v428
  %v519 = vpop.f32.mrb[0].mxu0
  %v520 = vadd.f32 %v391, %v519
  %v521 = vpop.f32.mrb[0].mxu0
  %522 = vmatprep.mubr.f32.mxu0 0.0
  %523 = vmatmul.mubr.f32.gmra.mrb[0].mxu0 %v431
  %v524 = vpop.f32.mrb[0].mxu0
  %v525 = vadd.f32 %v396, %v524
  %v526 = vpop.f32.mrb[0].mxu0
  %527 = vmatprep.mubr.f32.mxu0 0.0
  %528 = vmatmul.mubr.f32.gmra.mrb[0].mxu0 %v434
  %v529 = vpop.f32.mrb[0].mxu0
  %v530 = vadd.f32 %v401, %v529
  %v531 = vpop.f32.mrb[0].mxu0
  %532 = vmatprep.mubr.f32.mxu0 0.0
  %533 = vmatmul.mubr.f32.gmra.mrb[0].mxu0 %v437
  %v534 = vpop.f32.mrb[0].mxu0
  %v535 = vadd.f32 %v406, %v534
  %v536 = vpop.f32.mrb[0].mxu0
  %537 = vmatprep.mubr.f32.mxu0 0.0
  %538 = vmatmul.mubr.f32.gmra.mrb[0].mxu0 %v440
  %v539 = vpop.f32.mrb[0].mxu0
  %v540 = vadd.f32 %v411, %v539
  %v541 = vpop.f32.mrb[0].mxu0
  %542 = vmatprep.mubr.f32.mxu0 0.0
  %543 = vmatmul.mubr.f32.gmra.mrb[0].mxu0 %v443
  %v544 = vpop.f32.mrb[0].mxu0
  %v545 = vadd.f32 %v416, %v544
  %v546 = vpop.f32.mrb[0].mxu0
  %547 = vmatprep.mubr.f32.mxu0 0.0
  %548 = vmatmul.mubr.f32.gmra.mrb[0].mxu0 %v446
  %v549 = vpop.f32.mrb[0].mxu0
  %v550 = vadd.f32 %v421, %v549
  %v551 = vpop.f32.mrb[0].mxu0
  %552 = vdwg.mxu0
  %v553 = vmax.f32 %v515, 0.0
  %v554 = vmax.f32 %v520, 0.0
  %v555 = vmax.f32 %v525, 0.0
  %v556 = vmax.f32 %v530, 0.0
  %v557 = vmax.f32 %v535, 0.0
  %v558 = vmax.f32 %v540, 0.0
  %v559 = vmax.f32 %v545, 0.0
  %v560 = vmax.f32 %v550, 0.0
  %v561 = vld [vmem:[%s7] sm:$0xff]
  %v562 = vld [vmem:[%s7 + $0x8] sm:$0xff]
  %v563 = vld [vmem:[%s7 + $0x10] sm:$0xff]
  %v564 = vld [vmem:[%s7 + $0x18] sm:$0xff]
  %v565 = vld [vmem:[%s8] sm:$0xff]
  %v566 = vld [vmem:[%s8 + $0x8] sm:$0xff]
  %v567 = vld [vmem:[%s8 + $0x10] sm:$0xff]
  %v568 = vld [vmem:[%s8 + $0x18] sm:$0xff]
  %570 = vset.pattern.permute.xlu0 0
  %571 = vperm.xlu0 %570, %v565
  %v572 = vpop.permute.xlu0 %571
  %575 = vset.pattern.permute.xlu0 0
  %576 = vperm.xlu0 %575, %v566
  %v577 = vpop.permute.xlu0 %576
  %580 = vset.pattern.permute.xlu0 0
  %581 = vperm.xlu0 %580, %v567
  %v582 = vpop.permute.xlu0 %581
  %585 = vset.pattern.permute.xlu0 0
  %586 = vperm.xlu0 %585, %v568
  %v587 = vpop.permute.xlu0 %586
  %v590 = vsel %vm423, %v561, 0
  %v593 = vsel %vm423, %v562, 0
  %v596 = vsel %vm423, %v563, 0
  %v599 = vsel %vm423, %v564, 0
  %601 = vmatprep.subr.mxu0 0.0
  %602 = vmatpush1.msra.mxu0 %v553
  %603 = vmatprep.subr.mxu0 0.0
  %604 = vmatpush1.msra.mxu0 %v554
  %605 = vmatprep.subr.mxu0 0.0
  %606 = vmatpush1.msra.mxu0 %v555
  %607 = vmatprep.subr.mxu0 0.0
  %608 = vmatpush1.msra.mxu0 %v556
  %609 = vmatprep.subr.mxu0 0.0
  %610 = vmatpush1.msra.mxu0 %v557
  %611 = vmatprep.subr.mxu0 0.0
  %612 = vmatpush1.msra.mxu0 %v558
  %613 = vmatprep.subr.mxu0 0.0
  %614 = vmatpush1.msra.mxu0 %v559
  %615 = vmatprep.subr.mxu0 0.0
  %616 = vmatpush1.msra.mxu0 %v560
  %617 = vmatprep.subr.mxu0 0.0
  %618 = vmatpush1.msra.mxu0 0.0
  %619 = vmatprep.subr.mxu0 0.0
  %620 = vmatpush1.msra.mxu0 0.0
  %621 = vmatprep.subr.mxu0 0.0
  %622 = vmatpush1.msra.mxu0 0.0
  %623 = vmatprep.subr.mxu0 0.0
  %624 = vmatpush1.msra.mxu0 0.0
  %625 = vmatprep.subr.mxu0 0.0
  %626 = vmatpush1.msra.mxu0 0.0
  %627 = vmatprep.subr.mxu0 0.0
  %628 = vmatpush1.msra.mxu0 0.0
  %629 = vmatprep.subr.mxu0 0.0
  %630 = vmatpush1.msra.mxu0 0.0
  %631 = vmatprep.subr.mxu0 0.0
  %632 = vmatpush1.msra.mxu0 0.0
  %633 = vmatprep.subr.mxu0 0.0
  %634 = vmatpush1.msra.mxu0 0.0
  %635 = vmatprep.subr.mxu0 0.0
  %636 = vmatpush1.msra.mxu0 0.0
  %637 = vmatprep.subr.mxu0 0.0
  %638 = vmatpush1.msra.mxu0 0.0
  %639 = vmatprep.subr.mxu0 0.0
  %640 = vmatpush1.msra.mxu0 0.0
  %641 = vmatprep.subr.mxu0 0.0
  %642 = vmatpush1.msra.mxu0 0.0
  %643 = vmatprep.subr.mxu0 0.0
  %644 = vmatpush1.msra.mxu0 0.0
  %645 = vmatprep.subr.mxu0 0.0
  %646 = vmatpush1.msra.mxu0 0.0
  %647 = vmatprep.subr.mxu0 0.0
  %648 = vmatpush1.msra.mxu0 0.0
  %649 = vmatprep.subr.mxu0 0.0
  %650 = vmatpush1.msra.mxu0 0.0
  %651 = vmatprep.subr.mxu0 0.0
  %652 = vmatpush1.msra.mxu0 0.0
  %653 = vmatprep.subr.mxu0 0.0
  %654 = vmatpush1.msra.mxu0 0.0
  %655 = vmatprep.subr.mxu0 0.0
  %656 = vmatpush1.msra.mxu0 0.0
  %657 = vmatprep.subr.mxu0 0.0
  %658 = vmatpush1.msra.mxu0 0.0
  %659 = vmatprep.subr.mxu0 0.0
  %660 = vmatpush1.msra.mxu0 0.0
  %661 = vmatprep.subr.mxu0 0.0
  %662 = vmatpush1.msra.mxu0 0.0
  %663 = vmatprep.subr.mxu0 0.0
  %664 = vmatpush1.msra.mxu0 0.0
  %665 = vmatprep.mubr.f32.mxu0 0.0
  %666 = vmatmul.mubr.f32.gmra.mrb[0].mxu0 %v590
  %v667 = vpop.f32.mrb[0].mxu0
  %v668 = vadd.f32 %v572, %v667
  %v669 = vpop.f32.mrb[0].mxu0
  %670 = vmatprep.mubr.f32.mxu0 0.0
  %671 = vmatmul.mubr.f32.gmra.mrb[0].mxu0 %v593
  %v672 = vpop.f32.mrb[0].mxu0
  %v673 = vadd.f32 %v577, %v672
  %v674 = vpop.f32.mrb[0].mxu0
  %675 = vmatprep.mubr.f32.mxu0 0.0
  %676 = vmatmul.mubr.f32.gmra.mrb[0].mxu0 %v596
  %v677 = vpop.f32.mrb[0].mxu0
  %v678 = vadd.f32 %v582, %v677
  %v679 = vpop.f32.mrb[0].mxu0
  %680 = vmatprep.mubr.f32.mxu0 0.0
  %681 = vmatmul.mubr.f32.gmra.mrb[0].mxu0 %v599
  %v682 = vpop.f32.mrb[0].mxu0
  %v683 = vadd.f32 %v587, %v682
  %v684 = vpop.f32.mrb[0].mxu0
  %685 = vdwg.mxu0
  %v686 = vmax.f32 %v668, 0.0
  %v687 = vmax.f32 %v673, 0.0
  %v688 = vmax.f32 %v678, 0.0
  %v689 = vmax.f32 %v683, 0.0
  %v690 = vld [vmem:[%s9] sm:$0x7]
  %v691 = vld [vmem:[%s10] sm:$0x7]
  %693 = vset.pattern.permute.xlu0 0
  %694 = vperm.xlu0 %693, %v691
  %v695 = vpop.permute.xlu0 %694
  %v698 = vsel %vm229, %v690, 0
  %700 = vmatprep.subr.mxu0 0.0
  %701 = vmatpush1.msra.mxu0 %v686
  %702 = vmatprep.subr.mxu0 0.0
  %703 = vmatpush1.msra.mxu0 %v687
  %704 = vmatprep.subr.mxu0 0.0
  %705 = vmatpush1.msra.mxu0 %v688
  %706 = vmatprep.subr.mxu0 0.0
  %707 = vmatpush1.msra.mxu0 %v689
  %708 = vmatprep.subr.mxu0 0.0
  %709 = vmatpush1.msra.mxu0 0.0
  %710 = vmatprep.subr.mxu0 0.0
  %711 = vmatpush1.msra.mxu0 0.0
  %712 = vmatprep.subr.mxu0 0.0
  %713 = vmatpush1.msra.mxu0 0.0
  %714 = vmatprep.subr.mxu0 0.0
  %715 = vmatpush1.msra.mxu0 0.0
  %716 = vmatprep.subr.mxu0 0.0
  %717 = vmatpush1.msra.mxu0 0.0
  %718 = vmatprep.subr.mxu0 0.0
  %719 = vmatpush1.msra.mxu0 0.0
  %720 = vmatprep.subr.mxu0 0.0
  %721 = vmatpush1.msra.mxu0 0.0
  %722 = vmatprep.subr.mxu0 0.0
  %723 = vmatpush1.msra.mxu0 0.0
  %724 = vmatprep.subr.mxu0 0.0
  %725 = vmatpush1.msra.mxu0 0.0
  %726 = vmatprep.subr.mxu0 0.0
  %727 = vmatpush1.msra.mxu0 0.0
  %728 = vmatprep.subr.mxu0 0.0
  %729 = vmatpush1.msra.mxu0 0.0
  %730 = vmatprep.subr.mxu0 0.0
  %731 = vmatpush1.msra.mxu0 0.0
  %732 = vmatprep.subr.mxu0 0.0
  %733 = vmatpush1.msra.mxu0 0.0
  %734 = vmatprep.subr.mxu0 0.0
  %735 = vmatpush1.msra.mxu0 0.0
  %736 = vmatprep.subr.mxu0 0.0
  %737 = vmatpush1.msra.mxu0 0.0
  %738 = vmatprep.subr.mxu0 0.0
  %739 = vmatpush1.msra.mxu0 0.0
  %740 = vmatprep.subr.mxu0 0.0
  %741 = vmatpush1.msra.mxu0 0.0
  %742 = vmatprep.subr.mxu0 0.0
  %743 = vmatpush1.msra.mxu0 0.0
  %744 = vmatprep.subr.mxu0 0.0
  %745 = vmatpush1.msra.mxu0 0.0
  %746 = vmatprep.subr.mxu0 0.0
  %747 = vmatpush1.msra.mxu0 0.0
  %748 = vmatprep.subr.mxu0 0.0
  %749 = vmatpush1.msra.mxu0 0.0
  %750 = vmatprep.subr.mxu0 0.0
  %751 = vmatpush1.msra.mxu0 0.0
  %752 = vmatprep.subr.mxu0 0.0
  %753 = vmatpush1.msra.mxu0 0.0
  %754 = vmatprep.subr.mxu0 0.0
  %755 = vmatpush1.msra.mxu0 0.0
  %756 = vmatprep.subr.mxu0 0.0
  %757 = vmatpush1.msra.mxu0 0.0
  %758 = vmatprep.subr.mxu0 0.0
  %759 = vmatpush1.msra.mxu0 0.0
  %760 = vmatprep.subr.mxu0 0.0
  %761 = vmatpush1.msra.mxu0 0.0
  %762 = vmatprep.subr.mxu0 0.0
  %763 = vmatpush1.msra.mxu0 0.0
  %764 = vmatprep.mubr.f32.mxu0 0.0
  %765 = vmatmul.mubr.f32.gmra.mrb[0].mxu0 %v698
  %v766 = vpop.f32.mrb[0].mxu0
  %v767 = vadd.f32 %v695, %v766
  %v768 = vpop.f32.mrb[0].mxu0
  %769 = vdwg.mxu0
  %770 = vst [vmem:[%s11] sm:$0x7] %v767
  // Predicated region
  $region46: #{mlp_forward.1} parent=0 // pred_check
    _
  $region47: #{mlp_forward.1} parent=0 // pred_check_branch
    %772 = sbr.rel (0) target = $region49
  $region48: #{mlp_forward.1} parent=0 // pred_region
    _
  $region49: #{mlp_forward.1} parent=0 // pred_fallthru
    _
  // Predicated region
  $region50: #{mlp_forward.1} parent=0 // pred_check
    _
  $region51: #{mlp_forward.1} parent=0 // pred_check_branch
    %774 = sbr.rel (0) target = $region53
  $region52: #{mlp_forward.1} parent=0 // pred_region
    _
  $region53: #{mlp_forward.1} parent=0 // pred_fallthru
    _

</llo_original>
